<compile_context>
chip_gen: v5e
topology: v5e:2x2
jax: 0.10.0
libtpu: 0.0.40
codegen_flags: <defaults>
</compile_context>

<pallas_src>
import jax
import jax.numpy as jnp
from jax.experimental import pallas as pl
from jax.experimental.pallas import tpu as pltpu

IN_DIM = 28 * 28      # 784
HID = 200
OUT_DIM = 47

HID_PAD = 256         # 200 padded to a multiple of 128
OUT_PAD = 128         # 47  padded to a multiple of 128
MAX_TB = 512          # batch tile (multiple of 8 sublanes; ~1.6 MB f32 input tile)


def _round_up(x, m):
    return (x + m - 1) // m * m


def emlp_kernel(x_ref, w1_ref, b1_ref, w2_ref, b2_ref, w3_ref, b3_ref, o_ref):
    # x_ref : (TB, 784) f32        w1: (784, 256) bf16   b1: (1, 256) f32
    # w2    : (256, 256) bf16      b2: (1, 256) f32
    # w3    : (256, 128) bf16      b3: (1, 128) f32
    # o_ref : (TB, 128) f32
    x = x_ref[...].astype(jnp.bfloat16)

    h1 = jnp.dot(x, w1_ref[...], preferred_element_type=jnp.float32) + b1_ref[...]
    h1 = jnp.maximum(h1, 0.0).astype(jnp.bfloat16)   # ReLU; dropout = identity (eval)

    h2 = jnp.dot(h1, w2_ref[...], preferred_element_type=jnp.float32) + b2_ref[...]
    h2 = jnp.maximum(h2, 0.0).astype(jnp.bfloat16)   # ReLU; dropout = identity (eval)

    out = jnp.dot(h2, w3_ref[...], preferred_element_type=jnp.float32) + b3_ref[...]
    o_ref[...] = out.astype(o_ref.dtype)


def prepare_params(raw_params):
    """Pad feature dims to multiples of 128 and cast weights to bf16.
    raw_params: (w1 (784,200), b1 (1,200), w2 (200,200), b2 (1,200),
                 w3 (200,47),  b3 (1,47)) in f32, weight = torch weight.T."""
    w1, b1, w2, b2, w3, b3 = raw_params

    def pad_to(a, rows, cols):
        return jnp.pad(a, ((0, rows - a.shape[0]), (0, cols - a.shape[1])))

    w1p = pad_to(w1, IN_DIM, HID_PAD).astype(jnp.bfloat16)
    w2p = pad_to(w2, HID_PAD, HID_PAD).astype(jnp.bfloat16)
    w3p = pad_to(w3, HID_PAD, OUT_PAD).astype(jnp.bfloat16)
    b1p = pad_to(b1, 1, HID_PAD).astype(jnp.float32)
    b2p = pad_to(b2, 1, HID_PAD).astype(jnp.float32)
    b3p = pad_to(b3, 1, OUT_PAD).astype(jnp.float32)
    return (w1p, b1p, w2p, b2p, w3p, b3p)


def emlp_forward(x_nchw, packed_params):
    """x_nchw: (B, 1, 28, 28) float32.  Returns (B, 47) float32."""
    B = x_nchw.shape[0]
    x2d = x_nchw.reshape(B, -1).astype(jnp.float32)   # nn.Flatten()
    w1, b1, w2, b2, w3, b3 = packed_params

    TB = min(MAX_TB, _round_up(B, 8))        # batch tile (multiple of 8 sublanes)
    B_pad = _round_up(B, TB)
    if B_pad != B:
        x2d = jnp.pad(x2d, ((0, B_pad - B), (0, 0)))
    grid = (B_pad // TB,)

    flops = 2 * B_pad * (IN_DIM * HID_PAD + HID_PAD * HID_PAD + HID_PAD * OUT_PAD)
    bytes_accessed = (
        x2d.size * 4
        + (w1.size + w2.size + w3.size) * 2
        + (b1.size + b2.size + b3.size) * 4
        + B_pad * OUT_PAD * 4
    )

    out = pl.pallas_call(
        emlp_kernel,
        out_shape=jax.ShapeDtypeStruct((B_pad, OUT_PAD), jnp.float32),
        grid_spec=pltpu.PrefetchScalarGridSpec(
            num_scalar_prefetch=0,
            grid=grid,
            in_specs=[
                # batch-tiled input (double-buffered by the pipeline)
                pl.BlockSpec((TB, IN_DIM), lambda i: (i, 0)),
                # weights/biases: constant index_map -> DMA'd once, resident in VMEM
                pl.BlockSpec((IN_DIM, HID_PAD), lambda i: (0, 0)),
                pl.BlockSpec((1, HID_PAD), lambda i: (0, 0)),
                pl.BlockSpec((HID_PAD, HID_PAD), lambda i: (0, 0)),
                pl.BlockSpec((1, HID_PAD), lambda i: (0, 0)),
                pl.BlockSpec((HID_PAD, OUT_PAD), lambda i: (0, 0)),
                pl.BlockSpec((1, OUT_PAD), lambda i: (0, 0)),
            ],
            out_specs=pl.BlockSpec((TB, OUT_PAD), lambda i: (i, 0)),
        ),
        compiler_params=pltpu.CompilerParams(
            dimension_semantics=("parallel",),          # megacore on v7x
            vmem_limit_bytes=32 * 1024 * 1024,          # ~8 MB used incl. double buffering
        ),
        cost_estimate=pl.CostEstimate(
            flops=int(flops), transcendentals=0, bytes_accessed=int(bytes_accessed)),
    )(x2d, w1, b1, w2, b2, w3, b3)

    return out[:B, :OUT_DIM]


def init_params(key):
    """Deterministic init mimicking nn.Linear default: U(-1/sqrt(fan_in), +1/sqrt(fan_in)).
    Weights stored as (in_features, out_features) == torch weight.T."""
    ks = jax.random.split(key, 6)

    def linear(kw, kb, fan_in, fan_out):
        bound = 1.0 / jnp.sqrt(fan_in)
        w = jax.random.uniform(kw, (fan_in, fan_out), jnp.float32, -bound, bound)
        b = jax.random.uniform(kb, (1, fan_out), jnp.float32, -bound, bound)
        return w, b

    w1, b1 = linear(ks[0], ks[1], IN_DIM, HID)
    w2, b2 = linear(ks[2], ks[3], HID, HID)
    w3, b3 = linear(ks[4], ks[5], HID, OUT_DIM)
    return (w1, b1, w2, b2, w3, b3)


if __name__ == "__main__":
    key = jax.random.PRNGKey(0)
    kx, kp = jax.random.split(key)

    B = 8
    x = jax.random.normal(kx, (B, 1, 28, 28), dtype=jnp.float32)
    raw_params = init_params(kp)
    packed = prepare_params(raw_params)

    out = emlp_forward(x, packed)
    out = jax.block_until_ready(out)
    assert out.shape == (B, OUT_DIM)

    # Reference in plain JAX using the same bf16 weights / f32 accumulation.
    w1p, b1p, w2p, b2p, w3p, b3p = packed
    xf = x.reshape(B, -1)
    h1 = jnp.maximum(
        jnp.dot(xf.astype(jnp.bfloat16), w1p, preferred_element_type=jnp.float32) + b1p, 0.0)
    h2 = jnp.maximum(
        jnp.dot(h1.astype(jnp.bfloat16), w2p, preferred_element_type=jnp.float32) + b2p, 0.0)
    ref = (jnp.dot(h2.astype(jnp.bfloat16), w3p, preferred_element_type=jnp.float32)
           + b3p)[:, :OUT_DIM]

    assert jnp.allclose(out, ref, atol=1e-2, rtol=1e-2), (
        float(jnp.max(jnp.abs(out - ref))))

    print("KERNEL_OK")
</pallas_src>

<mosaic_0001>
module attributes {stable_mosaic.version = 11 : i64} {
  func.func @emlp_kernel(%arg0: i32, %arg1: memref<8x784xf32, #tpu.memory_space<vmem>>, %arg2: memref<784x256xbf16, #tpu.memory_space<vmem>>, %arg3: memref<1x256xf32, #tpu.memory_space<vmem>>, %arg4: memref<256x256xbf16, #tpu.memory_space<vmem>>, %arg5: memref<1x256xf32, #tpu.memory_space<vmem>>, %arg6: memref<256x128xbf16, #tpu.memory_space<vmem>>, %arg7: memref<1x128xf32, #tpu.memory_space<vmem>>, %arg8: memref<8x128xf32, #tpu.memory_space<vmem>>) attributes {dimension_semantics = [#tpu.dimension_semantics<parallel>], iteration_bounds = array<i64: 1>, scalar_prefetch = 0 : i64, scratch_operands = 0 : i64, tpu.core_type = #tpu.core_type<tc>, window_params = [{transform_indices = @transform_0, window_bounds = array<i64: 8, 784>}, {pipeline_mode = #tpu.pipeline_mode<synchronous>, transform_indices = @transform_1, window_bounds = array<i64: 784, 256>}, {pipeline_mode = #tpu.pipeline_mode<synchronous>, transform_indices = @transform_2, window_bounds = array<i64: 1, 256>}, {pipeline_mode = #tpu.pipeline_mode<synchronous>, transform_indices = @transform_3, window_bounds = array<i64: 256, 256>}, {pipeline_mode = #tpu.pipeline_mode<synchronous>, transform_indices = @transform_4, window_bounds = array<i64: 1, 256>}, {pipeline_mode = #tpu.pipeline_mode<synchronous>, transform_indices = @transform_5, window_bounds = array<i64: 256, 128>}, {pipeline_mode = #tpu.pipeline_mode<synchronous>, transform_indices = @transform_6, window_bounds = array<i64: 1, 128>}, {transform_indices = @transform_7, window_bounds = array<i64: 8, 128>}]} {
    %c0 = arith.constant 0 : index
    %c0_0 = arith.constant 0 : index
    %0 = vector.load %arg1[%c0, %c0_0] : memref<8x784xf32, #tpu.memory_space<vmem>>, vector<8x784xf32>
    %1 = arith.truncf %0 : vector<8x784xf32> to vector<8x784xbf16>
    %c0_1 = arith.constant 0 : index
    %c0_2 = arith.constant 0 : index
    %2 = vector.load %arg2[%c0_1, %c0_2] : memref<784x256xbf16, #tpu.memory_space<vmem>>, vector<784x256xbf16>
    %cst = arith.constant dense<0.000000e+00> : vector<8x256xf32>
    %3 = tpu.matmul %1, %2, %cst {dimension_numbers = #tpu.dot_dimension_numbers<[1], [0], [0], [1], [0, 0, 1, 1], [], []>} : vector<8x784xbf16>, vector<784x256xbf16>, vector<8x256xf32> -> vector<8x256xf32>
    %c0_3 = arith.constant 0 : index
    %c0_4 = arith.constant 0 : index
    %4 = vector.load %arg3[%c0_3, %c0_4] : memref<1x256xf32, #tpu.memory_space<vmem>>, vector<1x256xf32>
    %5 = vector.broadcast %4 : vector<1x256xf32> to vector<8x256xf32>
    %6 = arith.addf %3, %5 : vector<8x256xf32>
    %cst_5 = arith.constant 0.000000e+00 : f32
    %7 = vector.broadcast %cst_5 : f32 to vector<8x256xf32>
    %8 = arith.maximumf %6, %7 : vector<8x256xf32>
    %9 = arith.truncf %8 : vector<8x256xf32> to vector<8x256xbf16>
    %c0_6 = arith.constant 0 : index
    %c0_7 = arith.constant 0 : index
    %10 = vector.load %arg4[%c0_6, %c0_7] : memref<256x256xbf16, #tpu.memory_space<vmem>>, vector<256x256xbf16>
    %cst_8 = arith.constant dense<0.000000e+00> : vector<8x256xf32>
    %11 = tpu.matmul %9, %10, %cst_8 {dimension_numbers = #tpu.dot_dimension_numbers<[1], [0], [0], [1], [0, 0, 1, 1], [], []>} : vector<8x256xbf16>, vector<256x256xbf16>, vector<8x256xf32> -> vector<8x256xf32>
    %c0_9 = arith.constant 0 : index
    %c0_10 = arith.constant 0 : index
    %12 = vector.load %arg5[%c0_9, %c0_10] : memref<1x256xf32, #tpu.memory_space<vmem>>, vector<1x256xf32>
    %13 = vector.broadcast %12 : vector<1x256xf32> to vector<8x256xf32>
    %14 = arith.addf %11, %13 : vector<8x256xf32>
    %cst_11 = arith.constant 0.000000e+00 : f32
    %15 = vector.broadcast %cst_11 : f32 to vector<8x256xf32>
    %16 = arith.maximumf %14, %15 : vector<8x256xf32>
    %17 = arith.truncf %16 : vector<8x256xf32> to vector<8x256xbf16>
    %c0_12 = arith.constant 0 : index
    %c0_13 = arith.constant 0 : index
    %18 = vector.load %arg6[%c0_12, %c0_13] : memref<256x128xbf16, #tpu.memory_space<vmem>>, vector<256x128xbf16>
    %cst_14 = arith.constant dense<0.000000e+00> : vector<8x128xf32>
    %19 = tpu.matmul %17, %18, %cst_14 {dimension_numbers = #tpu.dot_dimension_numbers<[1], [0], [0], [1], [0, 0, 1, 1], [], []>} : vector<8x256xbf16>, vector<256x128xbf16>, vector<8x128xf32> -> vector<8x128xf32>
    %c0_15 = arith.constant 0 : index
    %c0_16 = arith.constant 0 : index
    %20 = vector.load %arg7[%c0_15, %c0_16] : memref<1x128xf32, #tpu.memory_space<vmem>>, vector<1x128xf32>
    %21 = vector.broadcast %20 : vector<1x128xf32> to vector<8x128xf32>
    %22 = arith.addf %19, %21 : vector<8x128xf32>
    %c0_17 = arith.constant 0 : index
    %c0_18 = arith.constant 0 : index
    %23 = vector.load %arg8[%c0_17, %c0_18] : memref<8x128xf32, #tpu.memory_space<vmem>>, vector<8x128xf32>
    tpu.vector_store %arg8[%c0_17, %c0_18], %22 {strides = array<i32>} : memref<8x128xf32, #tpu.memory_space<vmem>>, vector<8x128xf32>,
    return
  }
  func.func @transform_0(%arg0: i32) -> (i32, i32) {
    %c0_i32 = arith.constant 0 : i32
    %c0_i32_0 = arith.constant 0 : i32
    return %arg0, %c0_i32 : i32, i32
  }
  func.func @transform_1(%arg0: i32) -> (i32, i32) {
    %c0_i32 = arith.constant 0 : i32
    %c0_i32_0 = arith.constant 0 : i32
    %c0_i32_1 = arith.constant 0 : i32
    return %c0_i32, %c0_i32_0 : i32, i32
  }
  func.func @transform_2(%arg0: i32) -> (i32, i32) {
    %c0_i32 = arith.constant 0 : i32
    %c0_i32_0 = arith.constant 0 : i32
    %c0_i32_1 = arith.constant 0 : i32
    return %c0_i32, %c0_i32_0 : i32, i32
  }
  func.func @transform_3(%arg0: i32) -> (i32, i32) {
    %c0_i32 = arith.constant 0 : i32
    %c0_i32_0 = arith.constant 0 : i32
    %c0_i32_1 = arith.constant 0 : i32
    return %c0_i32, %c0_i32_0 : i32, i32
  }
  func.func @transform_4(%arg0: i32) -> (i32, i32) {
    %c0_i32 = arith.constant 0 : i32
    %c0_i32_0 = arith.constant 0 : i32
    %c0_i32_1 = arith.constant 0 : i32
    return %c0_i32, %c0_i32_0 : i32, i32
  }
  func.func @transform_5(%arg0: i32) -> (i32, i32) {
    %c0_i32 = arith.constant 0 : i32
    %c0_i32_0 = arith.constant 0 : i32
    %c0_i32_1 = arith.constant 0 : i32
    return %c0_i32, %c0_i32_0 : i32, i32
  }
  func.func @transform_6(%arg0: i32) -> (i32, i32) {
    %c0_i32 = arith.constant 0 : i32
    %c0_i32_0 = arith.constant 0 : i32
    %c0_i32_1 = arith.constant 0 : i32
    return %c0_i32, %c0_i32_0 : i32, i32
  }
  func.func @transform_7(%arg0: i32) -> (i32, i32) {
    %c0_i32 = arith.constant 0 : i32
    %c0_i32_0 = arith.constant 0 : i32
    return %arg0, %c0_i32 : i32, i32
  }
}

</mosaic_0001>

<llo_original>
// kernel: tpu_custom_call.1
$region0: #{tpu_custom_call.1}
  #allocation0 [shape = 'u32[]', space=smem, size = 0x4, offset = 0x4, fixed_abs, tag = 'smem constant byte address 0x4 - core index']
  #allocation1 [shape = 'u32[72,128]{1,0:T(1,128)}', space=vmem, size = 0x9000, scoped, tag = 'internal scratch']
  %s0 = inlined_call_operand.hbm [shape: f32[8,784], index: 0, kind: input, shape index: {}]
  %s1 = inlined_call_operand.hbm [shape: bf16[784,256], index: 1, kind: input, shape index: {}]
  %s2 = inlined_call_operand.hbm [shape: f32[1,256], index: 2, kind: input, shape index: {}]
  %s3 = inlined_call_operand.hbm [shape: bf16[256,256], index: 3, kind: input, shape index: {}]
  %s4 = inlined_call_operand.vmem [shape: f32[1,256], index: 4, kind: input, shape index: {}]
  %s5 = inlined_call_operand.hbm [shape: bf16[256,128], index: 5, kind: input, shape index: {}]
  %s6 = inlined_call_operand.vmem [shape: f32[1,128], index: 6, kind: input, shape index: {}]
  %s7 = inlined_call_operand.hbm [shape: f32[8,128], index: 7, kind: output, shape index: {}]
  %s8 = sld [smem:[#allocation0]]
  $region58: #{tpu_custom_call.1} parent=0
    _
  %s10 = ssub.s32 1, %s8
  %s11 = scalar_select 0, %s10, %s8
  $region1: #{tpu_custom_call.1} parent=0
    #allocation2 [shape = 'u8[28672]{0}', space=vmem, size = 0x7000, scoped, tag = 'input window, operand 0, single buffered']
    #allocation3 [shape = 's32[1]{0}', space=sflag, size = 0x4, scoped, tag = 'scoped memory for tpu_custom_call.1']
    #allocation4 [shape = 's32[1]{0}', space=sflag, size = 0x4, scoped, tag = 'scoped memory for tpu_custom_call.1']
    #allocation5 [shape = 'u8[401408]{0}', space=vmem, size = 0x62000, scoped, tag = 'input window, operand 1, single buffered']
    #allocation6 [shape = 's32[1]{0}', space=sflag, size = 0x4, scoped, tag = 'scoped memory for tpu_custom_call.1']
    #allocation7 [shape = 'u8[1024]{0}', space=vmem, size = 0x400, scoped, tag = 'input window, operand 2, single buffered']
    #allocation8 [shape = 'u8[131072]{0}', space=vmem, size = 0x20000, scoped, tag = 'input window, operand 3, single buffered']
    #allocation9 [shape = 's32[1]{0}', space=sflag, size = 0x4, scoped, tag = 'scoped memory for tpu_custom_call.1']
    #allocation10 [shape = 'u8[65536]{0}', space=vmem, size = 0x10000, scoped, tag = 'input window, operand 5, single buffered']
    #allocation11 [shape = 'u8[4096]{0}', space=vmem, size = 0x1000, scoped, tag = 'output window, operand 0, single buffered']
    %12 = vsyncpa [#allocation3], 0
    %13 = vsyncpa [#allocation6], 0
    %14 = vsyncpa [#allocation9], 0
    %15 = vsyncpa [#allocation4], 0
    // Predicated region
    $region2: #{tpu_custom_call.1} parent=1 // pred_check
      _
    $region3: #{tpu_custom_call.1} parent=1 // pred_check_branch
      %17 = sbr.rel (0) target = $region5
    $region4: #{tpu_custom_call.1} parent=1 // pred_region
      %19 = vsyncadd [#allocation3], 0
      %s21 = sshll.u32 %s0, 4
      %s22 = int_to_ptr.hbm [resolvable:$true] %s21
      %s23 = sshll.u32 [#allocation2], 4
      %s24 = int_to_ptr.vmem [resolvable:$true] %s23
      %26 = dma.hbm_to_vmem [thread:$0]  %s22, 896, %s24, [#allocation3]
    $region5: #{tpu_custom_call.1} parent=1 // pred_fallthru
      _
    // Predicated region
    $region6: #{tpu_custom_call.1} parent=1 // pred_check
      _
    $region7: #{tpu_custom_call.1} parent=1 // pred_check_branch
      %28 = sbr.rel (0) target = $region9
    $region8: #{tpu_custom_call.1} parent=1 // pred_region
      %30 = vsyncadd [#allocation6], 0
      %s31 = sshll.u32 %s1, 4
      %s32 = int_to_ptr.hbm [resolvable:$true] %s31
      %s33 = sshll.u32 [#allocation5], 4
      %s34 = int_to_ptr.vmem [resolvable:$true] %s33
      %39 = dma.hbm_to_vmem [thread:$0]  %s32, 12544, %s34, [#allocation6], 128, 128, 8
    $region9: #{tpu_custom_call.1} parent=1 // pred_fallthru
      _
    // Predicated region
    $region10: #{tpu_custom_call.1} parent=1 // pred_check
      _
    $region11: #{tpu_custom_call.1} parent=1 // pred_check_branch
      %41 = sbr.rel (0) target = $region13
    $region12: #{tpu_custom_call.1} parent=1 // pred_region
      %43 = vsyncadd [#allocation6], 0
      %s45 = sshll.u32 %s2, 4
      %s46 = int_to_ptr.hbm [resolvable:$true] %s45
      %s47 = sshll.u32 [#allocation7], 4
      %s48 = int_to_ptr.vmem [resolvable:$true] %s47
      %50 = dma.hbm_to_vmem [thread:$0]  %s46, 32, %s48, [#allocation6]
    $region13: #{tpu_custom_call.1} parent=1 // pred_fallthru
      _
    // Predicated region
    $region14: #{tpu_custom_call.1} parent=1 // pred_check
      _
    $region15: #{tpu_custom_call.1} parent=1 // pred_check_branch
      %52 = sbr.rel (0) target = $region17
    $region16: #{tpu_custom_call.1} parent=1 // pred_region
      %54 = vsyncadd [#allocation9], 0
      %s55 = sshll.u32 %s3, 4
      %s56 = int_to_ptr.hbm [resolvable:$true] %s55
      %s57 = sshll.u32 [#allocation8], 4
      %s58 = int_to_ptr.vmem [resolvable:$true] %s57
      %63 = dma.hbm_to_vmem [thread:$0]  %s56, 4096, %s58, [#allocation9], 128, 128, 8
    $region17: #{tpu_custom_call.1} parent=1 // pred_fallthru
      _
    // Predicated region
    $region18: #{tpu_custom_call.1} parent=1 // pred_check
      _
    $region19: #{tpu_custom_call.1} parent=1 // pred_check_branch
      %65 = sbr.rel (0) target = $region21
    $region20: #{tpu_custom_call.1} parent=1 // pred_region
      _
    $region21: #{tpu_custom_call.1} parent=1 // pred_fallthru
      _
    // Predicated region
    $region22: #{tpu_custom_call.1} parent=1 // pred_check
      _
    $region23: #{tpu_custom_call.1} parent=1 // pred_check_branch
      %67 = sbr.rel (0) target = $region25
    $region24: #{tpu_custom_call.1} parent=1 // pred_region
      %69 = vsyncadd [#allocation9], 0
      %s70 = sshll.u32 %s5, 4
      %s71 = int_to_ptr.hbm [resolvable:$true] %s70
      %s72 = sshll.u32 [#allocation10], 4
      %s73 = int_to_ptr.vmem [resolvable:$true] %s72
      %78 = dma.hbm_to_vmem [thread:$0]  %s71, 2048, %s73, [#allocation9], 64, 64, 4
    $region25: #{tpu_custom_call.1} parent=1 // pred_fallthru
      _
    // Predicated region
    $region26: #{tpu_custom_call.1} parent=1 // pred_check
      _
    $region27: #{tpu_custom_call.1} parent=1 // pred_check_branch
      %80 = sbr.rel (0) target = $region29
    $region28: #{tpu_custom_call.1} parent=1 // pred_region
      _
    $region29: #{tpu_custom_call.1} parent=1 // pred_fallthru
      _
    // Predicated region
    $region30: #{tpu_custom_call.1} parent=1 // pred_check
      _
    $region31: #{tpu_custom_call.1} parent=1 // pred_check_branch
      %82 = sbr.rel (0) target = $region33
    $region32: #{tpu_custom_call.1} parent=1 // pred_region
      %84 = dma.done [#allocation3], 896
    $region33: #{tpu_custom_call.1} parent=1 // pred_fallthru
      _
    // Predicated region
    $region34: #{tpu_custom_call.1} parent=1 // pred_check
      _
    $region35: #{tpu_custom_call.1} parent=1 // pred_check_branch
      %86 = sbr.rel (0) target = $region37
    $region36: #{tpu_custom_call.1} parent=1 // pred_region
      %88 = dma.done [#allocation6], 12544
    $region37: #{tpu_custom_call.1} parent=1 // pred_fallthru
      _
    // Predicated region
    $region38: #{tpu_custom_call.1} parent=1 // pred_check
      _
    $region39: #{tpu_custom_call.1} parent=1 // pred_check_branch
      %90 = sbr.rel (0) target = $region41
    $region40: #{tpu_custom_call.1} parent=1 // pred_region
      %92 = dma.done [#allocation6], 32
    $region41: #{tpu_custom_call.1} parent=1 // pred_fallthru
      _
    // Predicated region
    $region42: #{tpu_custom_call.1} parent=1 // pred_check
      _
    $region43: #{tpu_custom_call.1} parent=1 // pred_check_branch
      %94 = sbr.rel (0) target = $region45
    $region44: #{tpu_custom_call.1} parent=1 // pred_region
      %96 = dma.done [#allocation9], 4096
    $region45: #{tpu_custom_call.1} parent=1 // pred_fallthru
      _
    // Predicated region
    $region46: #{tpu_custom_call.1} parent=1 // pred_check
      _
    $region47: #{tpu_custom_call.1} parent=1 // pred_check_branch
      %98 = sbr.rel (0) target = $region49
    $region48: #{tpu_custom_call.1} parent=1 // pred_region
      %100 = dma.done [#allocation9], 2048
    $region49: #{tpu_custom_call.1} parent=1 // pred_fallthru
      _
    %v102 = vld [vmem:[#allocation2] sm:$0xff]
    %v103 = vld [vmem:[#allocation2 + $0x8] sm:$0xff]
    %v104 = vld [vmem:[#allocation2 + $0x10] sm:$0xff]
    %v105 = vld [vmem:[#allocation2 + $0x18] sm:$0xff]
    %v106 = vld [vmem:[#allocation2 + $0x20] sm:$0xff]
    %v107 = vld [vmem:[#allocation2 + $0x28] sm:$0xff]
    %v108 = vld [vmem:[#allocation2 + $0x30] sm:$0xff]
    %v109 = vpack.c.bf16 %v102, %v102
    %v110 = vpack.c.bf16 %v103, %v103
    %v111 = vpack.c.bf16 %v104, %v104
    %v112 = vpack.c.bf16 %v105, %v105
    %v113 = vpack.c.bf16 %v106, %v106
    %v114 = vpack.c.bf16 %v107, %v107
    %v115 = vpack.c.bf16 %v108, %v108
    %v116 = vld [vmem:[#allocation5] sm:$0xff]
    %v117 = vld [vmem:[#allocation5 + $0x8] sm:$0xff]
    %v118 = vld [vmem:[#allocation5 + $0x10] sm:$0xff]
    %v119 = vld [vmem:[#allocation5 + $0x18] sm:$0xff]
    %v120 = vld [vmem:[#allocation5 + $0x20] sm:$0xff]
    %v121 = vld [vmem:[#allocation5 + $0x28] sm:$0xff]
    %v122 = vld [vmem:[#allocation5 + $0x30] sm:$0xff]
    %v123 = vld [vmem:[#allocation5 + $0x38] sm:$0xff]
    %v124 = vld [vmem:[#allocation5 + $0x40] sm:$0xff]
    %v125 = vld [vmem:[#allocation5 + $0x48] sm:$0xff]
    %v126 = vld [vmem:[#allocation5 + $0x50] sm:$0xff]
    %v127 = vld [vmem:[#allocation5 + $0x58] sm:$0xff]
    %v128 = vld [vmem:[#allocation5 + $0x60] sm:$0xff]
    %v129 = vld [vmem:[#allocation5 + $0x68] sm:$0xff]
    %v130 = vld [vmem:[#allocation5 + $0x70] sm:$0xff]
    %v131 = vld [vmem:[#allocation5 + $0x78] sm:$0xff]
    %v132 = vld [vmem:[#allocation5 + $0x80] sm:$0xff]
    %v133 = vld [vmem:[#allocation5 + $0x88] sm:$0xff]
    %v134 = vld [vmem:[#allocation5 + $0x90] sm:$0xff]
    %v135 = vld [vmem:[#allocation5 + $0x98] sm:$0xff]
    %v136 = vld [vmem:[#allocation5 + $0xa0] sm:$0xff]
    %v137 = vld [vmem:[#allocation5 + $0xa8] sm:$0xff]
    %v138 = vld [vmem:[#allocation5 + $0xb0] sm:$0xff]
    %v139 = vld [vmem:[#allocation5 + $0xb8] sm:$0xff]
    %v140 = vld [vmem:[#allocation5 + $0xc0] sm:$0xff]
    %v141 = vld [vmem:[#allocation5 + $0xc8] sm:$0xff]
    %v142 = vld [vmem:[#allocation5 + $0xd0] sm:$0xff]
    %v143 = vld [vmem:[#allocation5 + $0xd8] sm:$0xff]
    %v144 = vld [vmem:[#allocation5 + $0xe0] sm:$0xff]
    %v145 = vld [vmem:[#allocation5 + $0xe8] sm:$0xff]
    %v146 = vld [vmem:[#allocation5 + $0xf0] sm:$0xff]
    %v147 = vld [vmem:[#allocation5 + $0xf8] sm:$0xff]
    %v148 = vld [vmem:[#allocation5 + $0x100] sm:$0xff]
    %v149 = vld [vmem:[#allocation5 + $0x108] sm:$0xff]
    %v150 = vld [vmem:[#allocation5 + $0x110] sm:$0xff]
    %v151 = vld [vmem:[#allocation5 + $0x118] sm:$0xff]
    %v152 = vld [vmem:[#allocation5 + $0x120] sm:$0xff]
    %v153 = vld [vmem:[#allocation5 + $0x128] sm:$0xff]
    %v154 = vld [vmem:[#allocation5 + $0x130] sm:$0xff]
    %v155 = vld [vmem:[#allocation5 + $0x138] sm:$0xff]
    %v156 = vld [vmem:[#allocation5 + $0x140] sm:$0xff]
    %v157 = vld [vmem:[#allocation5 + $0x148] sm:$0xff]
    %v158 = vld [vmem:[#allocation5 + $0x150] sm:$0xff]
    %v159 = vld [vmem:[#allocation5 + $0x158] sm:$0xff]
    %v160 = vld [vmem:[#allocation5 + $0x160] sm:$0xff]
    %v161 = vld [vmem:[#allocation5 + $0x168] sm:$0xff]
    %v162 = vld [vmem:[#allocation5 + $0x170] sm:$0xff]
    %v163 = vld [vmem:[#allocation5 + $0x178] sm:$0xff]
    %v164 = vld [vmem:[#allocation5 + $0x180] sm:$0xff]
    %v165 = vld [vmem:[#allocation5 + $0x188] sm:$0xff]
    %v166 = vld [vmem:[#allocation5 + $0x190] sm:$0xff]
    %v167 = vld [vmem:[#allocation5 + $0x198] sm:$0xff]
    %v168 = vld [vmem:[#allocation5 + $0x1a0] sm:$0xff]
    %v169 = vld [vmem:[#allocation5 + $0x1a8] sm:$0xff]
    %v170 = vld [vmem:[#allocation5 + $0x1b0] sm:$0xff]
    %v171 = vld [vmem:[#allocation5 + $0x1b8] sm:$0xff]
    %v172 = vld [vmem:[#allocation5 + $0x1c0] sm:$0xff]
    %v173 = vld [vmem:[#allocation5 + $0x1c8] sm:$0xff]
    %v174 = vld [vmem:[#allocation5 + $0x1d0] sm:$0xff]
    %v175 = vld [vmem:[#allocation5 + $0x1d8] sm:$0xff]
    %v176 = vld [vmem:[#allocation5 + $0x1e0] sm:$0xff]
    %v177 = vld [vmem:[#allocation5 + $0x1e8] sm:$0xff]
    %v178 = vld [vmem:[#allocation5 + $0x1f0] sm:$0xff]
    %v179 = vld [vmem:[#allocation5 + $0x1f8] sm:$0xff]
    %v180 = vld [vmem:[#allocation5 + $0x200] sm:$0xff]
    %v181 = vld [vmem:[#allocation5 + $0x208] sm:$0xff]
    %v182 = vld [vmem:[#allocation5 + $0x210] sm:$0xff]
    %v183 = vld [vmem:[#allocation5 + $0x218] sm:$0xff]
    %v184 = vld [vmem:[#allocation5 + $0x220] sm:$0xff]
    %v185 = vld [vmem:[#allocation5 + $0x228] sm:$0xff]
    %v186 = vld [vmem:[#allocation5 + $0x230] sm:$0xff]
    %v187 = vld [vmem:[#allocation5 + $0x238] sm:$0xff]
    %v188 = vld [vmem:[#allocation5 + $0x240] sm:$0xff]
    %v189 = vld [vmem:[#allocation5 + $0x248] sm:$0xff]
    %v190 = vld [vmem:[#allocation5 + $0x250] sm:$0xff]
    %v191 = vld [vmem:[#allocation5 + $0x258] sm:$0xff]
    %v192 = vld [vmem:[#allocation5 + $0x260] sm:$0xff]
    %v193 = vld [vmem:[#allocation5 + $0x268] sm:$0xff]
    %v194 = vld [vmem:[#allocation5 + $0x270] sm:$0xff]
    %v195 = vld [vmem:[#allocation5 + $0x278] sm:$0xff]
    %v196 = vld [vmem:[#allocation5 + $0x280] sm:$0xff]
    %v197 = vld [vmem:[#allocation5 + $0x288] sm:$0xff]
    %v198 = vld [vmem:[#allocation5 + $0x290] sm:$0xff]
    %v199 = vld [vmem:[#allocation5 + $0x298] sm:$0xff]
    %v200 = vld [vmem:[#allocation5 + $0x2a0] sm:$0xff]
    %v201 = vld [vmem:[#allocation5 + $0x2a8] sm:$0xff]
    %v202 = vld [vmem:[#allocation5 + $0x2b0] sm:$0xff]
    %v203 = vld [vmem:[#allocation5 + $0x2b8] sm:$0xff]
    %v204 = vld [vmem:[#allocation5 + $0x2c0] sm:$0xff]
    %v205 = vld [vmem:[#allocation5 + $0x2c8] sm:$0xff]
    %v206 = vld [vmem:[#allocation5 + $0x2d0] sm:$0xff]
    %v207 = vld [vmem:[#allocation5 + $0x2d8] sm:$0xff]
    %v208 = vld [vmem:[#allocation5 + $0x2e0] sm:$0xff]
    %v209 = vld [vmem:[#allocation5 + $0x2e8] sm:$0xff]
    %v210 = vld [vmem:[#allocation5 + $0x2f0] sm:$0xff]
    %v211 = vld [vmem:[#allocation5 + $0x2f8] sm:$0xff]
    %v212 = vld [vmem:[#allocation5 + $0x300] sm:$0xff]
    %v213 = vld [vmem:[#allocation5 + $0x308] sm:$0xff]
    %v214 = vld [vmem:[#allocation7] sm:$0x3]
    %v216 = vperm.slane %v214, 0
    %v217 = vperm.slane %v214, 1
    %v318 = vunpack.c.l.b16 %v116
    %v319 = vunpack.c.h.b16 %v116
    %v320 = vunpack.c.l.b16 %v117
    %v321 = vunpack.c.h.b16 %v117
    %v322 = vunpack.c.l.b16 %v118
    %v323 = vunpack.c.h.b16 %v118
    %v324 = vunpack.c.l.b16 %v119
    %v325 = vunpack.c.h.b16 %v119
    %v326 = vunpack.c.l.b16 %v120
    %v327 = vunpack.c.h.b16 %v120
    %v328 = vunpack.c.l.b16 %v121
    %v329 = vunpack.c.h.b16 %v121
    %v330 = vunpack.c.l.b16 %v122
    %v331 = vunpack.c.h.b16 %v122
    %v332 = vunpack.c.l.b16 %v123
    %v333 = vunpack.c.h.b16 %v123
    %v334 = vunpack.c.l.b16 %v124
    %v335 = vunpack.c.h.b16 %v124
    %v336 = vunpack.c.l.b16 %v125
    %v337 = vunpack.c.h.b16 %v125
    %v338 = vunpack.c.l.b16 %v126
    %v339 = vunpack.c.h.b16 %v126
    %v340 = vunpack.c.l.b16 %v127
    %v341 = vunpack.c.h.b16 %v127
    %v342 = vunpack.c.l.b16 %v128
    %v343 = vunpack.c.h.b16 %v128
    %v344 = vunpack.c.l.b16 %v129
    %v345 = vunpack.c.h.b16 %v129
    %v346 = vunpack.c.l.b16 %v130
    %v347 = vunpack.c.h.b16 %v130
    %v348 = vunpack.c.l.b16 %v131
    %v349 = vunpack.c.h.b16 %v131
    %v350 = vunpack.c.l.b16 %v132
    %v351 = vunpack.c.h.b16 %v132
    %v352 = vunpack.c.l.b16 %v133
    %v353 = vunpack.c.h.b16 %v133
    %v354 = vunpack.c.l.b16 %v134
    %v355 = vunpack.c.h.b16 %v134
    %v356 = vunpack.c.l.b16 %v135
    %v357 = vunpack.c.h.b16 %v135
    %v358 = vunpack.c.l.b16 %v136
    %v359 = vunpack.c.h.b16 %v136
    %v360 = vunpack.c.l.b16 %v137
    %v361 = vunpack.c.h.b16 %v137
    %v362 = vunpack.c.l.b16 %v138
    %v363 = vunpack.c.h.b16 %v138
    %v364 = vunpack.c.l.b16 %v139
    %v365 = vunpack.c.h.b16 %v139
    %v366 = vunpack.c.l.b16 %v140
    %v367 = vunpack.c.h.b16 %v140
    %v368 = vunpack.c.l.b16 %v141
    %v369 = vunpack.c.h.b16 %v141
    %v370 = vunpack.c.l.b16 %v142
    %v371 = vunpack.c.h.b16 %v142
    %v372 = vunpack.c.l.b16 %v143
    %v373 = vunpack.c.h.b16 %v143
    %v374 = vunpack.c.l.b16 %v144
    %v375 = vunpack.c.h.b16 %v144
    %v376 = vunpack.c.l.b16 %v145
    %v377 = vunpack.c.h.b16 %v145
    %v378 = vunpack.c.l.b16 %v146
    %v379 = vunpack.c.h.b16 %v146
    %v380 = vunpack.c.l.b16 %v147
    %v381 = vunpack.c.h.b16 %v147
    %v382 = vunpack.c.l.b16 %v148
    %v383 = vunpack.c.h.b16 %v148
    %v384 = vunpack.c.l.b16 %v149
    %v385 = vunpack.c.h.b16 %v149
    %v386 = vunpack.c.l.b16 %v150
    %v387 = vunpack.c.h.b16 %v150
    %v388 = vunpack.c.l.b16 %v151
    %v389 = vunpack.c.h.b16 %v151
    %v390 = vunpack.c.l.b16 %v152
    %v391 = vunpack.c.h.b16 %v152
    %v392 = vunpack.c.l.b16 %v153
    %v393 = vunpack.c.h.b16 %v153
    %v394 = vunpack.c.l.b16 %v154
    %v395 = vunpack.c.h.b16 %v154
    %v396 = vunpack.c.l.b16 %v155
    %v397 = vunpack.c.h.b16 %v155
    %v398 = vunpack.c.l.b16 %v156
    %v399 = vunpack.c.h.b16 %v156
    %v400 = vunpack.c.l.b16 %v157
    %v401 = vunpack.c.h.b16 %v157
    %v402 = vunpack.c.l.b16 %v158
    %v403 = vunpack.c.h.b16 %v158
    %v404 = vunpack.c.l.b16 %v159
    %v405 = vunpack.c.h.b16 %v159
    %v406 = vunpack.c.l.b16 %v160
    %v407 = vunpack.c.h.b16 %v160
    %v408 = vunpack.c.l.b16 %v161
    %v409 = vunpack.c.h.b16 %v161
    %v410 = vunpack.c.l.b16 %v162
    %v411 = vunpack.c.h.b16 %v162
    %v412 = vunpack.c.l.b16 %v163
    %v413 = vunpack.c.h.b16 %v163
    %v414 = vunpack.c.l.b16 %v164
    %v415 = vunpack.c.h.b16 %v164
    %v416 = vunpack.c.l.b16 %v165
    %v417 = vunpack.c.h.b16 %v165
    %v418 = vunpack.c.l.b16 %v166
    %v419 = vunpack.c.h.b16 %v166
    %v420 = vunpack.c.l.b16 %v167
    %v421 = vunpack.c.h.b16 %v167
    %v422 = vunpack.c.l.b16 %v168
    %v423 = vunpack.c.h.b16 %v168
    %v424 = vunpack.c.l.b16 %v169
    %v425 = vunpack.c.h.b16 %v169
    %v426 = vunpack.c.l.b16 %v170
    %v427 = vunpack.c.h.b16 %v170
    %v428 = vunpack.c.l.b16 %v171
    %v429 = vunpack.c.h.b16 %v171
    %v430 = vunpack.c.l.b16 %v172
    %v431 = vunpack.c.h.b16 %v172
    %v432 = vunpack.c.l.b16 %v173
    %v433 = vunpack.c.h.b16 %v173
    %v434 = vunpack.c.l.b16 %v174
    %v435 = vunpack.c.h.b16 %v174
    %v436 = vunpack.c.l.b16 %v175
    %v437 = vunpack.c.h.b16 %v175
    %v438 = vunpack.c.l.b16 %v176
    %v439 = vunpack.c.h.b16 %v176
    %v440 = vunpack.c.l.b16 %v177
    %v441 = vunpack.c.h.b16 %v177
    %v442 = vunpack.c.l.b16 %v178
    %v443 = vunpack.c.h.b16 %v178
    %v444 = vunpack.c.l.b16 %v179
    %v445 = vunpack.c.h.b16 %v179
    %v446 = vunpack.c.l.b16 %v180
    %v447 = vunpack.c.h.b16 %v180
    %v448 = vunpack.c.l.b16 %v181
    %v449 = vunpack.c.h.b16 %v181
    %v450 = vunpack.c.l.b16 %v182
    %v451 = vunpack.c.h.b16 %v182
    %v452 = vunpack.c.l.b16 %v183
    %v453 = vunpack.c.h.b16 %v183
    %v454 = vunpack.c.l.b16 %v184
    %v455 = vunpack.c.h.b16 %v184
    %v456 = vunpack.c.l.b16 %v185
    %v457 = vunpack.c.h.b16 %v185
    %v458 = vunpack.c.l.b16 %v186
    %v459 = vunpack.c.h.b16 %v186
    %v460 = vunpack.c.l.b16 %v187
    %v461 = vunpack.c.h.b16 %v187
    %v462 = vunpack.c.l.b16 %v188
    %v463 = vunpack.c.h.b16 %v188
    %v464 = vunpack.c.l.b16 %v189
    %v465 = vunpack.c.h.b16 %v189
    %v466 = vunpack.c.l.b16 %v190
    %v467 = vunpack.c.h.b16 %v190
    %v468 = vunpack.c.l.b16 %v191
    %v469 = vunpack.c.h.b16 %v191
    %v470 = vunpack.c.l.b16 %v192
    %v471 = vunpack.c.h.b16 %v192
    %v472 = vunpack.c.l.b16 %v193
    %v473 = vunpack.c.h.b16 %v193
    %v474 = vunpack.c.l.b16 %v194
    %v475 = vunpack.c.h.b16 %v194
    %v476 = vunpack.c.l.b16 %v195
    %v477 = vunpack.c.h.b16 %v195
    %v478 = vunpack.c.l.b16 %v196
    %v479 = vunpack.c.h.b16 %v196
    %v480 = vunpack.c.l.b16 %v197
    %v481 = vunpack.c.h.b16 %v197
    %v482 = vunpack.c.l.b16 %v198
    %v483 = vunpack.c.h.b16 %v198
    %v484 = vunpack.c.l.b16 %v199
    %v485 = vunpack.c.h.b16 %v199
    %v486 = vunpack.c.l.b16 %v200
    %v487 = vunpack.c.h.b16 %v200
    %v488 = vunpack.c.l.b16 %v201
    %v489 = vunpack.c.h.b16 %v201
    %v490 = vunpack.c.l.b16 %v202
    %v491 = vunpack.c.h.b16 %v202
    %v492 = vunpack.c.l.b16 %v203
    %v493 = vunpack.c.h.b16 %v203
    %v494 = vunpack.c.l.b16 %v204
    %v495 = vunpack.c.h.b16 %v204
    %v496 = vunpack.c.l.b16 %v205
    %v497 = vunpack.c.h.b16 %v205
    %v498 = vunpack.c.l.b16 %v206
    %v499 = vunpack.c.h.b16 %v206
    %v500 = vunpack.c.l.b16 %v207
    %v501 = vunpack.c.h.b16 %v207
    %v502 = vunpack.c.l.b16 %v208
    %v503 = vunpack.c.h.b16 %v208
    %v504 = vunpack.c.l.b16 %v209
    %v505 = vunpack.c.h.b16 %v209
    %v506 = vunpack.c.l.b16 %v210
    %v507 = vunpack.c.h.b16 %v210
    %v508 = vunpack.c.l.b16 %v211
    %v509 = vunpack.c.h.b16 %v211
    %v510 = vunpack.c.l.b16 %v212
    %v511 = vunpack.c.h.b16 %v212
    %v512 = vunpack.c.l.b16 %v213
    %v513 = vunpack.c.h.b16 %v213
    %v514 = vpack.c.b16 %v320, %v318
    %v515 = vpack.c.b16 %v321, %v319
    %v516 = vpack.c.b16 %v324, %v322
    %v517 = vpack.c.b16 %v325, %v323
    %v518 = vpack.c.b16 %v328, %v326
    %v519 = vpack.c.b16 %v329, %v327
    %v520 = vpack.c.b16 %v332, %v330
    %v521 = vpack.c.b16 %v333, %v331
    %v522 = vpack.c.b16 %v336, %v334
    %v523 = vpack.c.b16 %v337, %v335
    %v524 = vpack.c.b16 %v340, %v338
    %v525 = vpack.c.b16 %v341, %v339
    %v526 = vpack.c.b16 %v344, %v342
    %v527 = vpack.c.b16 %v345, %v343
    %v528 = vpack.c.b16 %v348, %v346
    %v529 = vpack.c.b16 %v349, %v347
    %v530 = vpack.c.b16 %v352, %v350
    %v531 = vpack.c.b16 %v353, %v351
    %v532 = vpack.c.b16 %v356, %v354
    %v533 = vpack.c.b16 %v357, %v355
    %v534 = vpack.c.b16 %v360, %v358
    %v535 = vpack.c.b16 %v361, %v359
    %v536 = vpack.c.b16 %v364, %v362
    %v537 = vpack.c.b16 %v365, %v363
    %v538 = vpack.c.b16 %v368, %v366
    %v539 = vpack.c.b16 %v369, %v367
    %v540 = vpack.c.b16 %v372, %v370
    %v541 = vpack.c.b16 %v373, %v371
    %v542 = vpack.c.b16 %v376, %v374
    %v543 = vpack.c.b16 %v377, %v375
    %v544 = vpack.c.b16 %v380, %v378
    %v545 = vpack.c.b16 %v381, %v379
    %v546 = vpack.c.b16 %v384, %v382
    %v547 = vpack.c.b16 %v385, %v383
    %v548 = vpack.c.b16 %v388, %v386
    %v549 = vpack.c.b16 %v389, %v387
    %v550 = vpack.c.b16 %v392, %v390
    %v551 = vpack.c.b16 %v393, %v391
    %v552 = vpack.c.b16 %v396, %v394
    %v553 = vpack.c.b16 %v397, %v395
    %v554 = vpack.c.b16 %v400, %v398
    %v555 = vpack.c.b16 %v401, %v399
    %v556 = vpack.c.b16 %v404, %v402
    %v557 = vpack.c.b16 %v405, %v403
    %v558 = vpack.c.b16 %v408, %v406
    %v559 = vpack.c.b16 %v409, %v407
    %v560 = vpack.c.b16 %v412, %v410
    %v561 = vpack.c.b16 %v413, %v411
    %v562 = vpack.c.b16 %v416, %v414
    %v563 = vpack.c.b16 %v417, %v415
    %v564 = vpack.c.b16 %v420, %v418
    %v565 = vpack.c.b16 %v421, %v419
    %v566 = vpack.c.b16 %v424, %v422
    %v567 = vpack.c.b16 %v425, %v423
    %v568 = vpack.c.b16 %v428, %v426
    %v569 = vpack.c.b16 %v429, %v427
    %v570 = vpack.c.b16 %v432, %v430
    %v571 = vpack.c.b16 %v433, %v431
    %v572 = vpack.c.b16 %v436, %v434
    %v573 = vpack.c.b16 %v437, %v435
    %v574 = vpack.c.b16 %v440, %v438
    %v575 = vpack.c.b16 %v441, %v439
    %v576 = vpack.c.b16 %v444, %v442
    %v577 = vpack.c.b16 %v445, %v443
    %v578 = vpack.c.b16 %v448, %v446
    %v579 = vpack.c.b16 %v449, %v447
    %v580 = vpack.c.b16 %v452, %v450
    %v581 = vpack.c.b16 %v453, %v451
    %v582 = vpack.c.b16 %v456, %v454
    %v583 = vpack.c.b16 %v457, %v455
    %v584 = vpack.c.b16 %v460, %v458
    %v585 = vpack.c.b16 %v461, %v459
    %v586 = vpack.c.b16 %v464, %v462
    %v587 = vpack.c.b16 %v465, %v463
    %v588 = vpack.c.b16 %v468, %v466
    %v589 = vpack.c.b16 %v469, %v467
    %v590 = vpack.c.b16 %v472, %v470
    %v591 = vpack.c.b16 %v473, %v471
    %v592 = vpack.c.b16 %v476, %v474
    %v593 = vpack.c.b16 %v477, %v475
    %v594 = vpack.c.b16 %v480, %v478
    %v595 = vpack.c.b16 %v481, %v479
    %v596 = vpack.c.b16 %v484, %v482
    %v597 = vpack.c.b16 %v485, %v483
    %v598 = vpack.c.b16 %v488, %v486
    %v599 = vpack.c.b16 %v489, %v487
    %v600 = vpack.c.b16 %v492, %v490
    %v601 = vpack.c.b16 %v493, %v491
    %v602 = vpack.c.b16 %v496, %v494
    %v603 = vpack.c.b16 %v497, %v495
    %v604 = vpack.c.b16 %v500, %v498
    %v605 = vpack.c.b16 %v501, %v499
    %v606 = vpack.c.b16 %v504, %v502
    %v607 = vpack.c.b16 %v505, %v503
    %v608 = vpack.c.b16 %v508, %v506
    %v609 = vpack.c.b16 %v509, %v507
    %v610 = vpack.c.b16 %v512, %v510
    %v611 = vpack.c.b16 %v513, %v511
    %vm710 = vcmask 130048
    %v712 = vsel %vm710, %v115, 0
    %714 = vmatpush.bf16.msra.mxu0 %v528
    %715 = vmatpush.bf16.msra.mxu0 %v526
    %716 = vmatpush.bf16.msra.mxu0 %v524
    %717 = vmatpush.bf16.msra.mxu0 %v522
    %718 = vmatpush.bf16.msra.mxu0 %v520
    %719 = vmatpush.bf16.msra.mxu0 %v518
    %720 = vmatpush.bf16.msra.mxu0 %v516
    %721 = vmatpush.bf16.msra.mxu0 %v514
    %722 = vmatmul.bf16.gmra.mxu0 %v109
    %v723 = vpop.f32.mrf.mxu0
    %v724 = vadd.f32 %v216, %v723
    %v725 = vpop.f32.mrf.mxu0
    %726 = vdwg.mxu0
    %727 = vmatpush.bf16.msra.mxu0 %v544
    %728 = vmatpush.bf16.msra.mxu0 %v542
    %729 = vmatpush.bf16.msra.mxu0 %v540
    %730 = vmatpush.bf16.msra.mxu0 %v538
    %731 = vmatpush.bf16.msra.mxu0 %v536
    %732 = vmatpush.bf16.msra.mxu0 %v534
    %733 = vmatpush.bf16.msra.mxu0 %v532
    %734 = vmatpush.bf16.msra.mxu0 %v530
    %735 = vmatmul.bf16.gmra.mxu0 %v110
    %v736 = vpop.f32.mrf.mxu0
    %v737 = vadd.f32 %v724, %v736
    %v738 = vpop.f32.mrf.mxu0
    %739 = vdwg.mxu0
    %740 = vmatpush.bf16.msra.mxu0 %v560
    %741 = vmatpush.bf16.msra.mxu0 %v558
    %742 = vmatpush.bf16.msra.mxu0 %v556
    %743 = vmatpush.bf16.msra.mxu0 %v554
    %744 = vmatpush.bf16.msra.mxu0 %v552
    %745 = vmatpush.bf16.msra.mxu0 %v550
    %746 = vmatpush.bf16.msra.mxu0 %v548
    %747 = vmatpush.bf16.msra.mxu0 %v546
    %748 = vmatmul.bf16.gmra.mxu0 %v111
    %v749 = vpop.f32.mrf.mxu0
    %v750 = vadd.f32 %v737, %v749
    %v751 = vpop.f32.mrf.mxu0
    %752 = vdwg.mxu0
    %753 = vmatpush.bf16.msra.mxu0 %v576
    %754 = vmatpush.bf16.msra.mxu0 %v574
    %755 = vmatpush.bf16.msra.mxu0 %v572
    %756 = vmatpush.bf16.msra.mxu0 %v570
    %757 = vmatpush.bf16.msra.mxu0 %v568
    %758 = vmatpush.bf16.msra.mxu0 %v566
    %759 = vmatpush.bf16.msra.mxu0 %v564
    %760 = vmatpush.bf16.msra.mxu0 %v562
    %761 = vmatmul.bf16.gmra.mxu0 %v112
    %v762 = vpop.f32.mrf.mxu0
    %v763 = vadd.f32 %v750, %v762
    %v764 = vpop.f32.mrf.mxu0
    %765 = vdwg.mxu0
    %766 = vmatpush.bf16.msra.mxu0 %v592
    %767 = vmatpush.bf16.msra.mxu0 %v590
    %768 = vmatpush.bf16.msra.mxu0 %v588
    %769 = vmatpush.bf16.msra.mxu0 %v586
    %770 = vmatpush.bf16.msra.mxu0 %v584
    %771 = vmatpush.bf16.msra.mxu0 %v582
    %772 = vmatpush.bf16.msra.mxu0 %v580
    %773 = vmatpush.bf16.msra.mxu0 %v578
    %774 = vmatmul.bf16.gmra.mxu0 %v113
    %v775 = vpop.f32.mrf.mxu0
    %v776 = vadd.f32 %v763, %v775
    %v777 = vpop.f32.mrf.mxu0
    %778 = vdwg.mxu0
    %779 = vmatpush.bf16.msra.mxu0 %v608
    %780 = vmatpush.bf16.msra.mxu0 %v606
    %781 = vmatpush.bf16.msra.mxu0 %v604
    %782 = vmatpush.bf16.msra.mxu0 %v602
    %783 = vmatpush.bf16.msra.mxu0 %v600
    %784 = vmatpush.bf16.msra.mxu0 %v598
    %785 = vmatpush.bf16.msra.mxu0 %v596
    %786 = vmatpush.bf16.msra.mxu0 %v594
    %787 = vmatmul.bf16.gmra.mxu0 %v114
    %v788 = vpop.f32.mrf.mxu0
    %v789 = vadd.f32 %v776, %v788
    %v790 = vpop.f32.mrf.mxu0
    %791 = vdwg.mxu0
    %792 = vmatpush.bf16.msra.mxu0 0
    %793 = vmatpush.bf16.msra.mxu0 0
    %794 = vmatpush.bf16.msra.mxu0 0
    %795 = vmatpush.bf16.msra.mxu0 0
    %796 = vmatpush.bf16.msra.mxu0 0
    %797 = vmatpush.bf16.msra.mxu0 0
    %798 = vmatpush.bf16.msra.mxu0 0
    %799 = vmatpush.bf16.msra.mxu0 %v610
    %800 = vmatmul.bf16.gmra.mxu0 %v712
    %v801 = vpop.f32.mrf.mxu0
    %v802 = vadd.f32 %v789, %v801
    %v803 = vpop.f32.mrf.mxu0
    %804 = vdwg.mxu0
    %805 = vmatpush.bf16.msra.mxu0 %v529
    %806 = vmatpush.bf16.msra.mxu0 %v527
    %807 = vmatpush.bf16.msra.mxu0 %v525
    %808 = vmatpush.bf16.msra.mxu0 %v523
    %809 = vmatpush.bf16.msra.mxu0 %v521
    %810 = vmatpush.bf16.msra.mxu0 %v519
    %811 = vmatpush.bf16.msra.mxu0 %v517
    %812 = vmatpush.bf16.msra.mxu0 %v515
    %813 = vmatmul.bf16.gmra.mxu0 %v109
    %v814 = vpop.f32.mrf.mxu0
    %v815 = vadd.f32 %v217, %v814
    %v816 = vpop.f32.mrf.mxu0
    %817 = vdwg.mxu0
    %818 = vmatpush.bf16.msra.mxu0 %v545
    %819 = vmatpush.bf16.msra.mxu0 %v543
    %820 = vmatpush.bf16.msra.mxu0 %v541
    %821 = vmatpush.bf16.msra.mxu0 %v539
    %822 = vmatpush.bf16.msra.mxu0 %v537
    %823 = vmatpush.bf16.msra.mxu0 %v535
    %824 = vmatpush.bf16.msra.mxu0 %v533
    %825 = vmatpush.bf16.msra.mxu0 %v531
    %826 = vmatmul.bf16.gmra.mxu0 %v110
    %v827 = vpop.f32.mrf.mxu0
    %v828 = vadd.f32 %v815, %v827
    %v829 = vpop.f32.mrf.mxu0
    %830 = vdwg.mxu0
    %831 = vmatpush.bf16.msra.mxu0 %v561
    %832 = vmatpush.bf16.msra.mxu0 %v559
    %833 = vmatpush.bf16.msra.mxu0 %v557
    %834 = vmatpush.bf16.msra.mxu0 %v555
    %835 = vmatpush.bf16.msra.mxu0 %v553
    %836 = vmatpush.bf16.msra.mxu0 %v551
    %837 = vmatpush.bf16.msra.mxu0 %v549
    %838 = vmatpush.bf16.msra.mxu0 %v547
    %839 = vmatmul.bf16.gmra.mxu0 %v111
    %v840 = vpop.f32.mrf.mxu0
    %v841 = vadd.f32 %v828, %v840
    %v842 = vpop.f32.mrf.mxu0
    %843 = vdwg.mxu0
    %844 = vmatpush.bf16.msra.mxu0 %v577
    %845 = vmatpush.bf16.msra.mxu0 %v575
    %846 = vmatpush.bf16.msra.mxu0 %v573
    %847 = vmatpush.bf16.msra.mxu0 %v571
    %848 = vmatpush.bf16.msra.mxu0 %v569
    %849 = vmatpush.bf16.msra.mxu0 %v567
    %850 = vmatpush.bf16.msra.mxu0 %v565
    %851 = vmatpush.bf16.msra.mxu0 %v563
    %852 = vmatmul.bf16.gmra.mxu0 %v112
    %v853 = vpop.f32.mrf.mxu0
    %v854 = vadd.f32 %v841, %v853
    %v855 = vpop.f32.mrf.mxu0
    %856 = vdwg.mxu0
    %857 = vmatpush.bf16.msra.mxu0 %v593
    %858 = vmatpush.bf16.msra.mxu0 %v591
    %859 = vmatpush.bf16.msra.mxu0 %v589
    %860 = vmatpush.bf16.msra.mxu0 %v587
    %861 = vmatpush.bf16.msra.mxu0 %v585
    %862 = vmatpush.bf16.msra.mxu0 %v583
    %863 = vmatpush.bf16.msra.mxu0 %v581
    %864 = vmatpush.bf16.msra.mxu0 %v579
    %865 = vmatmul.bf16.gmra.mxu0 %v113
    %v866 = vpop.f32.mrf.mxu0
    %v867 = vadd.f32 %v854, %v866
    %v868 = vpop.f32.mrf.mxu0
    %869 = vdwg.mxu0
    %870 = vmatpush.bf16.msra.mxu0 %v609
    %871 = vmatpush.bf16.msra.mxu0 %v607
    %872 = vmatpush.bf16.msra.mxu0 %v605
    %873 = vmatpush.bf16.msra.mxu0 %v603
    %874 = vmatpush.bf16.msra.mxu0 %v601
    %875 = vmatpush.bf16.msra.mxu0 %v599
    %876 = vmatpush.bf16.msra.mxu0 %v597
    %877 = vmatpush.bf16.msra.mxu0 %v595
    %878 = vmatmul.bf16.gmra.mxu0 %v114
    %v879 = vpop.f32.mrf.mxu0
    %v880 = vadd.f32 %v867, %v879
    %v881 = vpop.f32.mrf.mxu0
    %882 = vdwg.mxu0
    %883 = vmatpush.bf16.msra.mxu0 0
    %884 = vmatpush.bf16.msra.mxu0 0
    %885 = vmatpush.bf16.msra.mxu0 0
    %886 = vmatpush.bf16.msra.mxu0 0
    %887 = vmatpush.bf16.msra.mxu0 0
    %888 = vmatpush.bf16.msra.mxu0 0
    %889 = vmatpush.bf16.msra.mxu0 0
    %890 = vmatpush.bf16.msra.mxu0 %v611
    %891 = vmatmul.bf16.gmra.mxu0 %v712
    %v892 = vpop.f32.mrf.mxu0
    %v893 = vadd.f32 %v880, %v892
    %v894 = vpop.f32.mrf.mxu0
    %895 = vdwg.mxu0
    %v896 = vmax.f32 %v802, 0.0
    %v897 = vmax.f32 %v893, 0.0
    %v898 = vpack.c.bf16 %v896, %v896
    %v899 = vpack.c.bf16 %v897, %v897
    %v900 = vld [vmem:[#allocation8] sm:$0xff]
    %v901 = vld [vmem:[#allocation8 + $0x8] sm:$0xff]
    %v902 = vld [vmem:[#allocation8 + $0x10] sm:$0xff]
    %v903 = vld [vmem:[#allocation8 + $0x18] sm:$0xff]
    %v904 = vld [vmem:[#allocation8 + $0x20] sm:$0xff]
    %v905 = vld [vmem:[#allocation8 + $0x28] sm:$0xff]
    %v906 = vld [vmem:[#allocation8 + $0x30] sm:$0xff]
    %v907 = vld [vmem:[#allocation8 + $0x38] sm:$0xff]
    %v908 = vld [vmem:[#allocation8 + $0x40] sm:$0xff]
    %v909 = vld [vmem:[#allocation8 + $0x48] sm:$0xff]
    %v910 = vld [vmem:[#allocation8 + $0x50] sm:$0xff]
    %v911 = vld [vmem:[#allocation8 + $0x58] sm:$0xff]
    %v912 = vld [vmem:[#allocation8 + $0x60] sm:$0xff]
    %v913 = vld [vmem:[#allocation8 + $0x68] sm:$0xff]
    %v914 = vld [vmem:[#allocation8 + $0x70] sm:$0xff]
    %v915 = vld [vmem:[#allocation8 + $0x78] sm:$0xff]
    %v916 = vld [vmem:[#allocation8 + $0x80] sm:$0xff]
    %v917 = vld [vmem:[#allocation8 + $0x88] sm:$0xff]
    %v918 = vld [vmem:[#allocation8 + $0x90] sm:$0xff]
    %v919 = vld [vmem:[#allocation8 + $0x98] sm:$0xff]
    %v920 = vld [vmem:[#allocation8 + $0xa0] sm:$0xff]
    %v921 = vld [vmem:[#allocation8 + $0xa8] sm:$0xff]
    %v922 = vld [vmem:[#allocation8 + $0xb0] sm:$0xff]
    %v923 = vld [vmem:[#allocation8 + $0xb8] sm:$0xff]
    %v924 = vld [vmem:[#allocation8 + $0xc0] sm:$0xff]
    %v925 = vld [vmem:[#allocation8 + $0xc8] sm:$0xff]
    %v926 = vld [vmem:[#allocation8 + $0xd0] sm:$0xff]
    %v927 = vld [vmem:[#allocation8 + $0xd8] sm:$0xff]
    %v928 = vld [vmem:[#allocation8 + $0xe0] sm:$0xff]
    %v929 = vld [vmem:[#allocation8 + $0xe8] sm:$0xff]
    %v930 = vld [vmem:[#allocation8 + $0xf0] sm:$0xff]
    %v931 = vld [vmem:[#allocation8 + $0xf8] sm:$0xff]
    %v932 = vld [vmem:[%s4] sm:$0x3]
    %v934 = vperm.slane %v932, 0
    %v935 = vperm.slane %v932, 1
    %v970 = vunpack.c.l.b16 %v900
    %v971 = vunpack.c.h.b16 %v900
    %v972 = vunpack.c.l.b16 %v901
    %v973 = vunpack.c.h.b16 %v901
    %v974 = vunpack.c.l.b16 %v902
    %v975 = vunpack.c.h.b16 %v902
    %v976 = vunpack.c.l.b16 %v903
    %v977 = vunpack.c.h.b16 %v903
    %v978 = vunpack.c.l.b16 %v904
    %v979 = vunpack.c.h.b16 %v904
    %v980 = vunpack.c.l.b16 %v905
    %v981 = vunpack.c.h.b16 %v905
    %v982 = vunpack.c.l.b16 %v906
    %v983 = vunpack.c.h.b16 %v906
    %v984 = vunpack.c.l.b16 %v907
    %v985 = vunpack.c.h.b16 %v907
    %v986 = vunpack.c.l.b16 %v908
    %v987 = vunpack.c.h.b16 %v908
    %v988 = vunpack.c.l.b16 %v909
    %v989 = vunpack.c.h.b16 %v909
    %v990 = vunpack.c.l.b16 %v910
    %v991 = vunpack.c.h.b16 %v910
    %v992 = vunpack.c.l.b16 %v911
    %v993 = vunpack.c.h.b16 %v911
    %v994 = vunpack.c.l.b16 %v912
    %v995 = vunpack.c.h.b16 %v912
    %v996 = vunpack.c.l.b16 %v913
    %v997 = vunpack.c.h.b16 %v913
    %v998 = vunpack.c.l.b16 %v914
    %v999 = vunpack.c.h.b16 %v914
    %v1000 = vunpack.c.l.b16 %v915
    %v1001 = vunpack.c.h.b16 %v915
    %v1002 = vunpack.c.l.b16 %v916
    %v1003 = vunpack.c.h.b16 %v916
    %v1004 = vunpack.c.l.b16 %v917
    %v1005 = vunpack.c.h.b16 %v917
    %v1006 = vunpack.c.l.b16 %v918
    %v1007 = vunpack.c.h.b16 %v918
    %v1008 = vunpack.c.l.b16 %v919
    %v1009 = vunpack.c.h.b16 %v919
    %v1010 = vunpack.c.l.b16 %v920
    %v1011 = vunpack.c.h.b16 %v920
    %v1012 = vunpack.c.l.b16 %v921
    %v1013 = vunpack.c.h.b16 %v921
    %v1014 = vunpack.c.l.b16 %v922
    %v1015 = vunpack.c.h.b16 %v922
    %v1016 = vunpack.c.l.b16 %v923
    %v1017 = vunpack.c.h.b16 %v923
    %v1018 = vunpack.c.l.b16 %v924
    %v1019 = vunpack.c.h.b16 %v924
    %v1020 = vunpack.c.l.b16 %v925
    %v1021 = vunpack.c.h.b16 %v925
    %v1022 = vunpack.c.l.b16 %v926
    %v1023 = vunpack.c.h.b16 %v926
    %v1024 = vunpack.c.l.b16 %v927
    %v1025 = vunpack.c.h.b16 %v927
    %v1026 = vunpack.c.l.b16 %v928
    %v1027 = vunpack.c.h.b16 %v928
    %v1028 = vunpack.c.l.b16 %v929
    %v1029 = vunpack.c.h.b16 %v929
    %v1030 = vunpack.c.l.b16 %v930
    %v1031 = vunpack.c.h.b16 %v930
    %v1032 = vunpack.c.l.b16 %v931
    %v1033 = vunpack.c.h.b16 %v931
    %v1034 = vpack.c.b16 %v972, %v970
    %v1035 = vpack.c.b16 %v973, %v971
    %v1036 = vpack.c.b16 %v976, %v974
    %v1037 = vpack.c.b16 %v977, %v975
    %v1038 = vpack.c.b16 %v980, %v978
    %v1039 = vpack.c.b16 %v981, %v979
    %v1040 = vpack.c.b16 %v984, %v982
    %v1041 = vpack.c.b16 %v985, %v983
    %v1042 = vpack.c.b16 %v988, %v986
    %v1043 = vpack.c.b16 %v989, %v987
    %v1044 = vpack.c.b16 %v992, %v990
    %v1045 = vpack.c.b16 %v993, %v991
    %v1046 = vpack.c.b16 %v996, %v994
    %v1047 = vpack.c.b16 %v997, %v995
    %v1048 = vpack.c.b16 %v1000, %v998
    %v1049 = vpack.c.b16 %v1001, %v999
    %v1050 = vpack.c.b16 %v1004, %v1002
    %v1051 = vpack.c.b16 %v1005, %v1003
    %v1052 = vpack.c.b16 %v1008, %v1006
    %v1053 = vpack.c.b16 %v1009, %v1007
    %v1054 = vpack.c.b16 %v1012, %v1010
    %v1055 = vpack.c.b16 %v1013, %v1011
    %v1056 = vpack.c.b16 %v1016, %v1014
    %v1057 = vpack.c.b16 %v1017, %v1015
    %v1058 = vpack.c.b16 %v1020, %v1018
    %v1059 = vpack.c.b16 %v1021, %v1019
    %v1060 = vpack.c.b16 %v1024, %v1022
    %v1061 = vpack.c.b16 %v1025, %v1023
    %v1062 = vpack.c.b16 %v1028, %v1026
    %v1063 = vpack.c.b16 %v1029, %v1027
    %v1064 = vpack.c.b16 %v1032, %v1030
    %v1065 = vpack.c.b16 %v1033, %v1031
    %1098 = vmatpush.bf16.msra.mxu0 %v1048
    %1099 = vmatpush.bf16.msra.mxu0 %v1046
    %1100 = vmatpush.bf16.msra.mxu0 %v1044
    %1101 = vmatpush.bf16.msra.mxu0 %v1042
    %1102 = vmatpush.bf16.msra.mxu0 %v1040
    %1103 = vmatpush.bf16.msra.mxu0 %v1038
    %1104 = vmatpush.bf16.msra.mxu0 %v1036
    %1105 = vmatpush.bf16.msra.mxu0 %v1034
    %1106 = vmatmul.bf16.gmra.mxu0 %v898
    %v1107 = vpop.f32.mrf.mxu0
    %v1108 = vadd.f32 %v934, %v1107
    %v1109 = vpop.f32.mrf.mxu0
    %1110 = vdwg.mxu0
    %1111 = vmatpush.bf16.msra.mxu0 %v1064
    %1112 = vmatpush.bf16.msra.mxu0 %v1062
    %1113 = vmatpush.bf16.msra.mxu0 %v1060
    %1114 = vmatpush.bf16.msra.mxu0 %v1058
    %1115 = vmatpush.bf16.msra.mxu0 %v1056
    %1116 = vmatpush.bf16.msra.mxu0 %v1054
    %1117 = vmatpush.bf16.msra.mxu0 %v1052
    %1118 = vmatpush.bf16.msra.mxu0 %v1050
    %1119 = vmatmul.bf16.gmra.mxu0 %v899
    %v1120 = vpop.f32.mrf.mxu0
    %v1121 = vadd.f32 %v1108, %v1120
    %v1122 = vpop.f32.mrf.mxu0
    %1123 = vdwg.mxu0
    %1124 = vmatpush.bf16.msra.mxu0 %v1049
    %1125 = vmatpush.bf16.msra.mxu0 %v1047
    %1126 = vmatpush.bf16.msra.mxu0 %v1045
    %1127 = vmatpush.bf16.msra.mxu0 %v1043
    %1128 = vmatpush.bf16.msra.mxu0 %v1041
    %1129 = vmatpush.bf16.msra.mxu0 %v1039
    %1130 = vmatpush.bf16.msra.mxu0 %v1037
    %1131 = vmatpush.bf16.msra.mxu0 %v1035
    %1132 = vmatmul.bf16.gmra.mxu0 %v898
    %v1133 = vpop.f32.mrf.mxu0
    %v1134 = vadd.f32 %v935, %v1133
    %v1135 = vpop.f32.mrf.mxu0
    %1136 = vdwg.mxu0
    %1137 = vmatpush.bf16.msra.mxu0 %v1065
    %1138 = vmatpush.bf16.msra.mxu0 %v1063
    %1139 = vmatpush.bf16.msra.mxu0 %v1061
    %1140 = vmatpush.bf16.msra.mxu0 %v1059
    %1141 = vmatpush.bf16.msra.mxu0 %v1057
    %1142 = vmatpush.bf16.msra.mxu0 %v1055
    %1143 = vmatpush.bf16.msra.mxu0 %v1053
    %1144 = vmatpush.bf16.msra.mxu0 %v1051
    %1145 = vmatmul.bf16.gmra.mxu0 %v899
    %v1146 = vpop.f32.mrf.mxu0
    %v1147 = vadd.f32 %v1134, %v1146
    %v1148 = vpop.f32.mrf.mxu0
    %1149 = vdwg.mxu0
    %v1150 = vmax.f32 %v1121, 0.0
    %v1151 = vmax.f32 %v1147, 0.0
    %v1152 = vpack.c.bf16 %v1150, %v1150
    %v1153 = vpack.c.bf16 %v1151, %v1151
    %v1154 = vld [vmem:[#allocation10] sm:$0xf]
    %v1155 = vld [vmem:[#allocation10 + $0x4] sm:$0xf]
    %v1156 = vld [vmem:[#allocation10 + $0x8] sm:$0xf]
    %v1157 = vld [vmem:[#allocation10 + $0xc] sm:$0xf]
    %v1158 = vld [vmem:[#allocation10 + $0x10] sm:$0xf]
    %v1159 = vld [vmem:[#allocation10 + $0x14] sm:$0xf]
    %v1160 = vld [vmem:[#allocation10 + $0x18] sm:$0xf]
    %v1161 = vld [vmem:[#allocation10 + $0x1c] sm:$0xf]
    %v1162 = vld [vmem:[#allocation10 + $0x20] sm:$0xf]
    %v1163 = vld [vmem:[#allocation10 + $0x24] sm:$0xf]
    %v1164 = vld [vmem:[#allocation10 + $0x28] sm:$0xf]
    %v1165 = vld [vmem:[#allocation10 + $0x2c] sm:$0xf]
    %v1166 = vld [vmem:[#allocation10 + $0x30] sm:$0xf]
    %v1167 = vld [vmem:[#allocation10 + $0x34] sm:$0xf]
    %v1168 = vld [vmem:[#allocation10 + $0x38] sm:$0xf]
    %v1169 = vld [vmem:[#allocation10 + $0x3c] sm:$0xf]
    %v1170 = vld [vmem:[#allocation10 + $0x40] sm:$0xf]
    %v1171 = vld [vmem:[#allocation10 + $0x44] sm:$0xf]
    %v1172 = vld [vmem:[#allocation10 + $0x48] sm:$0xf]
    %v1173 = vld [vmem:[#allocation10 + $0x4c] sm:$0xf]
    %v1174 = vld [vmem:[#allocation10 + $0x50] sm:$0xf]
    %v1175 = vld [vmem:[#allocation10 + $0x54] sm:$0xf]
    %v1176 = vld [vmem:[#allocation10 + $0x58] sm:$0xf]
    %v1177 = vld [vmem:[#allocation10 + $0x5c] sm:$0xf]
    %v1178 = vld [vmem:[#allocation10 + $0x60] sm:$0xf]
    %v1179 = vld [vmem:[#allocation10 + $0x64] sm:$0xf]
    %v1180 = vld [vmem:[#allocation10 + $0x68] sm:$0xf]
    %v1181 = vld [vmem:[#allocation10 + $0x6c] sm:$0xf]
    %v1182 = vld [vmem:[#allocation10 + $0x70] sm:$0xf]
    %v1183 = vld [vmem:[#allocation10 + $0x74] sm:$0xf]
    %v1184 = vld [vmem:[#allocation10 + $0x78] sm:$0xf]
    %v1185 = vld [vmem:[#allocation10 + $0x7c] sm:$0xf]
    %v1186 = vld [vmem:[%s6] sm:$0x1]
    %v1188 = vperm.slane %v1186, 0
    %v1222 = vunpack.c.l.b16 %v1154
    %v1223 = vunpack.c.l.b16 %v1155
    %v1224 = vunpack.c.l.b16 %v1156
    %v1225 = vunpack.c.l.b16 %v1157
    %v1226 = vunpack.c.l.b16 %v1158
    %v1227 = vunpack.c.l.b16 %v1159
    %v1228 = vunpack.c.l.b16 %v1160
    %v1229 = vunpack.c.l.b16 %v1161
    %v1230 = vunpack.c.l.b16 %v1162
    %v1231 = vunpack.c.l.b16 %v1163
    %v1232 = vunpack.c.l.b16 %v1164
    %v1233 = vunpack.c.l.b16 %v1165
    %v1234 = vunpack.c.l.b16 %v1166
    %v1235 = vunpack.c.l.b16 %v1167
    %v1236 = vunpack.c.l.b16 %v1168
    %v1237 = vunpack.c.l.b16 %v1169
    %v1238 = vunpack.c.l.b16 %v1170
    %v1239 = vunpack.c.l.b16 %v1171
    %v1240 = vunpack.c.l.b16 %v1172
    %v1241 = vunpack.c.l.b16 %v1173
    %v1242 = vunpack.c.l.b16 %v1174
    %v1243 = vunpack.c.l.b16 %v1175
    %v1244 = vunpack.c.l.b16 %v1176
    %v1245 = vunpack.c.l.b16 %v1177
    %v1246 = vunpack.c.l.b16 %v1178
    %v1247 = vunpack.c.l.b16 %v1179
    %v1248 = vunpack.c.l.b16 %v1180
    %v1249 = vunpack.c.l.b16 %v1181
    %v1250 = vunpack.c.l.b16 %v1182
    %v1251 = vunpack.c.l.b16 %v1183
    %v1252 = vunpack.c.l.b16 %v1184
    %v1253 = vunpack.c.l.b16 %v1185
    %v1254 = vpack.c.b16 %v1223, %v1222
    %v1255 = vpack.c.b16 %v1225, %v1224
    %v1256 = vpack.c.b16 %v1227, %v1226
    %v1257 = vpack.c.b16 %v1229, %v1228
    %v1258 = vpack.c.b16 %v1231, %v1230
    %v1259 = vpack.c.b16 %v1233, %v1232
    %v1260 = vpack.c.b16 %v1235, %v1234
    %v1261 = vpack.c.b16 %v1237, %v1236
    %v1262 = vpack.c.b16 %v1239, %v1238
    %v1263 = vpack.c.b16 %v1241, %v1240
    %v1264 = vpack.c.b16 %v1243, %v1242
    %v1265 = vpack.c.b16 %v1245, %v1244
    %v1266 = vpack.c.b16 %v1247, %v1246
    %v1267 = vpack.c.b16 %v1249, %v1248
    %v1268 = vpack.c.b16 %v1251, %v1250
    %v1269 = vpack.c.b16 %v1253, %v1252
    %1286 = vmatpush.bf16.msra.mxu0 %v1261
    %1287 = vmatpush.bf16.msra.mxu0 %v1260
    %1288 = vmatpush.bf16.msra.mxu0 %v1259
    %1289 = vmatpush.bf16.msra.mxu0 %v1258
    %1290 = vmatpush.bf16.msra.mxu0 %v1257
    %1291 = vmatpush.bf16.msra.mxu0 %v1256
    %1292 = vmatpush.bf16.msra.mxu0 %v1255
    %1293 = vmatpush.bf16.msra.mxu0 %v1254
    %1294 = vmatmul.bf16.gmra.mxu0 %v1152
    %v1295 = vpop.f32.mrf.mxu0
    %v1296 = vadd.f32 %v1188, %v1295
    %v1297 = vpop.f32.mrf.mxu0
    %1298 = vdwg.mxu0
    %1299 = vmatpush.bf16.msra.mxu0 %v1269
    %1300 = vmatpush.bf16.msra.mxu0 %v1268
    %1301 = vmatpush.bf16.msra.mxu0 %v1267
    %1302 = vmatpush.bf16.msra.mxu0 %v1266
    %1303 = vmatpush.bf16.msra.mxu0 %v1265
    %1304 = vmatpush.bf16.msra.mxu0 %v1264
    %1305 = vmatpush.bf16.msra.mxu0 %v1263
    %1306 = vmatpush.bf16.msra.mxu0 %v1262
    %1307 = vmatmul.bf16.gmra.mxu0 %v1153
    %v1308 = vpop.f32.mrf.mxu0
    %v1309 = vadd.f32 %v1296, %v1308
    %v1310 = vpop.f32.mrf.mxu0
    %1311 = vdwg.mxu0
    %1312 = vst [vmem:[#allocation11] sm:$0xff] %v1309
    // Predicated region
    $region50: #{tpu_custom_call.1} parent=1 // pred_check
      _
    $region51: #{tpu_custom_call.1} parent=1 // pred_check_branch
      %1314 = sbr.rel (0) target = $region53
    $region52: #{tpu_custom_call.1} parent=1 // pred_region
      %1316 = vsyncadd [#allocation4], 0
      %s1318 = sshll.u32 [#allocation11], 4
      %s1319 = int_to_ptr.vmem [resolvable:$true] %s1318
      %s1320 = sshll.u32 %s7, 4
      %s1321 = int_to_ptr.hbm [resolvable:$true] %s1320
      %1323 = dma.vmem_to_hbm [thread:$0]  %s1319, 128, %s1321, [#allocation4]
    $region53: #{tpu_custom_call.1} parent=1 // pred_fallthru
      _
    // Predicated region
    $region54: #{tpu_custom_call.1} parent=1 // pred_check
      _
    $region55: #{tpu_custom_call.1} parent=1 // pred_check_branch
      %1325 = sbr.rel (0) target = $region57
    $region56: #{tpu_custom_call.1} parent=1 // pred_region
      %1327 = dma.done [#allocation4], 128
    $region57: #{tpu_custom_call.1} parent=1 // pred_fallthru
      _
    %1328 = vsyncpa [#allocation3], 1
    %1329 = vsyncpa [#allocation6], 1
    %1330 = vsyncpa [#allocation9], 1
    %1331 = vsyncpa [#allocation4], 1

</llo_original>
